<compile_context>
chip_gen: v5e
topology: v5e:2x2
jax: 0.10.0
libtpu: 0.0.40
codegen_flags: <defaults>
</compile_context>

<pallas_src>
import functools

import jax
import jax.numpy as jnp
from jax.experimental import pallas as pl
from jax.experimental.pallas import tpu as pltpu


# Cap on a *single* input tile (bytes). 8 MiB already amortizes the ~0.35 us
# per-grid-step overhead to <4% even at v7x's 3.2 TB/s HBM.
_SINGLE_TILE_CAP_BYTES = 8 * 1024 * 1024
# When the tensor is large enough, keep at least this many grid steps so the
# software pipeline overlaps DMA/compute and v7x megacore gets >= 2 shards.
_MIN_GRID_STEPS = 4


def _vmem_budgets():
    """Generation-aware (vmem_limit_bytes, tile_budget_bytes)."""
    try:
        cap = pltpu.get_tpu_info().vmem_capacity_bytes
    except Exception:  # pragma: no cover - fallback if query unavailable
        cap = 64 * 1024 * 1024  # conservative: v7x per-TensorCore VMEM
    # Leave >= 1/3 of physical VMEM for Mosaic internal scratch / temporaries.
    vmem_limit = min((cap * 5) // 8, 48 * 1024 * 1024)   # 40 MiB on v7x, 48 MiB on v5e/v6e
    tile_budget = min((cap * 3) // 8, 24 * 1024 * 1024)  # 24 MiB everywhere
    return vmem_limit, tile_budget


def _rmsnorm_kernel(x_ref, g_ref, o_ref, *, eps: float):
    # x_ref: (tile_rows, C) block of the flattened input
    # g_ref: (1, C) gamma in f32, resident across all grid steps
    x = x_ref[...].astype(jnp.float32)
    ms = jnp.mean(x * x, axis=-1, keepdims=True)  # (tile_rows, 1)
    inv = jax.lax.rsqrt(ms + eps)                 # rsqrt -> EUP (free slot)
    o_ref[...] = (x * inv * g_ref[...]).astype(o_ref.dtype)


def _pick_tile_rows(rows: int, C: int, itemsize: int, tile_budget: int) -> int:
    """Row-tile size: sublane-aligned, budget-fitting, grid-step-friendly."""
    # Sublane packing: 8 rows/vreg for 4-byte dtypes, 16 for 2-byte, 32 for 1-byte.
    sublane = max(8, 32 // max(itemsize, 1))
    rows_up = ((rows + sublane - 1) // sublane) * sublane

    # Double-buffered input + output tiles; for sub-32-bit inputs also account
    # for the in-kernel f32 upcast temporaries (~2 * C * 4 bytes/row).
    per_row_bytes = 4 * C * itemsize
    if itemsize < 4:
        per_row_bytes += 2 * C * 4
    t = max(sublane, tile_budget // per_row_bytes)

    # Byte-based cap on a single input tile (replaces the old 1024-row cap).
    t = min(t, max(sublane, _SINGLE_TILE_CAP_BYTES // (C * itemsize)))

    # Keep the grid at >= _MIN_GRID_STEPS steps for large tensors (>= 2 when
    # possible) so the pipeline overlaps and v7x megacore splits the work.
    if rows_up >= _MIN_GRID_STEPS * sublane:
        t = min(t, max(sublane, rows_up // _MIN_GRID_STEPS))
    elif rows_up >= 2 * sublane:
        t = min(t, rows_up // 2)

    t = max(sublane, (t // sublane) * sublane)
    return min(t, rows_up)


def rmsnorm(x: jax.Array, gamma: jax.Array, eps: float = 1e-5,
            tile_rows: int | None = None) -> jax.Array:
    """RMSNorm over the last axis of x ([B, T, C]) with per-channel gamma."""
    B, T, C = x.shape
    rows = B * T

    x2d = x.reshape(rows, C)
    g2d = gamma.astype(jnp.float32).reshape(1, C)

    vmem_limit, tile_budget = _vmem_budgets()
    itemsize = jnp.dtype(x.dtype).itemsize
    if tile_rows is None:
        tile_rows = _pick_tile_rows(rows, C, itemsize, tile_budget)

    # Ragged last block (rows % tile_rows != 0) is handled by Pallas masking:
    # out-of-bounds rows are never written and there is no cross-row reduction.
    grid = (pl.cdiv(rows, tile_rows),)

    # NOTE: when C is not a multiple of 128 the output stores are lane-masked
    # (vst.msk); perf there is lane-width-gated. Common hidden sizes (128-mult)
    # get fully dense stores.
    out2d = pl.pallas_call(
        functools.partial(_rmsnorm_kernel, eps=eps),
        out_shape=jax.ShapeDtypeStruct((rows, C), x.dtype),
        grid=grid,
        in_specs=[
            pl.BlockSpec((tile_rows, C), lambda i: (i, 0)),  # x row tile
            pl.BlockSpec((1, C), lambda i: (0, 0)),          # gamma (resident)
        ],
        out_specs=pl.BlockSpec((tile_rows, C), lambda i: (i, 0)),
        compiler_params=pltpu.CompilerParams(
            dimension_semantics=("parallel",),   # megacore-shards rows on v7x
            vmem_limit_bytes=vmem_limit,
        ),
    )(x2d, g2d)

    return out2d.reshape(B, T, C)


if __name__ == "__main__":
    # Small shapes consistent with the module's [B, T, C] forward.
    B, T, C = 2, 8, 32
    key = jax.random.PRNGKey(0)
    x = jax.random.normal(key, (B, T, C), dtype=jnp.float32)

    # Deterministic parameter init (matches nn.Parameter(torch.ones(C))).
    gamma = jnp.ones((C,), dtype=jnp.float32)
    eps = 1e-5

    out = jax.block_until_ready(rmsnorm(x, gamma, eps))

    # Reference check in plain JAX (same math as the PyTorch forward).
    ref = x / jnp.sqrt(jnp.mean(x * x, axis=-1, keepdims=True) + eps) * gamma
    assert out.shape == (B, T, C)
    assert jnp.allclose(out, ref, atol=1e-5, rtol=1e-5)

    # Exercise the ragged-last-block path (rows not a multiple of tile_rows).
    B2, T2, C2 = 3, 37, 256
    x2 = jax.random.normal(jax.random.PRNGKey(1), (B2, T2, C2), dtype=jnp.float32)
    g2 = jax.random.normal(jax.random.PRNGKey(2), (C2,), dtype=jnp.float32)
    out2 = jax.block_until_ready(rmsnorm(x2, g2, eps))
    ref2 = x2 / jnp.sqrt(jnp.mean(x2 * x2, axis=-1, keepdims=True) + eps) * g2
    assert jnp.allclose(out2, ref2, atol=1e-5, rtol=1e-5)

    # bf16 input path (exercises the f32-upcast tile-sizing branch).
    x3 = jax.random.normal(jax.random.PRNGKey(3), (2, 24, 256), dtype=jnp.bfloat16)
    g3 = jnp.ones((256,), dtype=jnp.float32)
    out3 = jax.block_until_ready(rmsnorm(x3, g3, eps))
    x3f = x3.astype(jnp.float32)
    ref3 = (x3f / jnp.sqrt(jnp.mean(x3f * x3f, axis=-1, keepdims=True) + eps) * g3
            ).astype(jnp.bfloat16)
    assert jnp.allclose(out3.astype(jnp.float32), ref3.astype(jnp.float32),
                        atol=2e-2, rtol=2e-2)

    print("KERNEL_OK")
</pallas_src>

<mosaic_0001>
module attributes {stable_mosaic.version = 11 : i64} {
  func.func @_rmsnorm_kernel(%arg0: i32, %arg1: memref<8x32xf32, #tpu.memory_space<vmem>>, %arg2: memref<1x32xf32, #tpu.memory_space<vmem>>, %arg3: memref<8x32xf32, #tpu.memory_space<vmem>>) attributes {dimension_semantics = [#tpu.dimension_semantics<parallel>], iteration_bounds = array<i64: 2>, scalar_prefetch = 0 : i64, scratch_operands = 0 : i64, tpu.core_type = #tpu.core_type<tc>, window_params = [{transform_indices = @transform_0, window_bounds = array<i64: 8, 32>}, {pipeline_mode = #tpu.pipeline_mode<synchronous>, transform_indices = @transform_1, window_bounds = array<i64: 1, 32>}, {transform_indices = @transform_2, window_bounds = array<i64: 8, 32>}]} {
    %c0 = arith.constant 0 : index
    %c0_0 = arith.constant 0 : index
    %0 = vector.load %arg1[%c0, %c0_0] : memref<8x32xf32, #tpu.memory_space<vmem>>, vector<8x32xf32>
    %1 = arith.mulf %0, %0 : vector<8x32xf32>
    %cst = arith.constant dense<0.000000e+00> : vector<8xf32>
    %2 = vector.multi_reduction <add>, %1, %cst [1] : vector<8x32xf32> to vector<8xf32>
    %3 = vector.shape_cast %2 : vector<8xf32> to vector<8x1xf32>
    %cst_1 = arith.constant 3.200000e+01 : f32
    %4 = vector.broadcast %cst_1 : f32 to vector<8x1xf32>
    %5 = arith.divf %3, %4 : vector<8x1xf32>
    %cst_2 = arith.constant 9.99999974E-6 : f32
    %6 = vector.broadcast %cst_2 : f32 to vector<8x1xf32>
    %7 = arith.addf %5, %6 : vector<8x1xf32>
    %8 = math.rsqrt %7 : vector<8x1xf32>
    %9 = vector.broadcast %8 : vector<8x1xf32> to vector<8x32xf32>
    %10 = arith.mulf %0, %9 : vector<8x32xf32>
    %c0_3 = arith.constant 0 : index
    %c0_4 = arith.constant 0 : index
    %11 = vector.load %arg2[%c0_3, %c0_4] : memref<1x32xf32, #tpu.memory_space<vmem>>, vector<1x32xf32>
    %12 = vector.broadcast %11 : vector<1x32xf32> to vector<8x32xf32>
    %13 = arith.mulf %10, %12 : vector<8x32xf32>
    %c0_5 = arith.constant 0 : index
    %c0_6 = arith.constant 0 : index
    %14 = vector.load %arg3[%c0_5, %c0_6] : memref<8x32xf32, #tpu.memory_space<vmem>>, vector<8x32xf32>
    tpu.vector_store %arg3[%c0_5, %c0_6], %13 {strides = array<i32>} : memref<8x32xf32, #tpu.memory_space<vmem>>, vector<8x32xf32>,
    return
  }
  func.func @transform_0(%arg0: i32) -> (i32, i32) {
    %c0_i32 = arith.constant 0 : i32
    %c0_i32_0 = arith.constant 0 : i32
    return %arg0, %c0_i32 : i32, i32
  }
  func.func @transform_1(%arg0: i32) -> (i32, i32) {
    %c0_i32 = arith.constant 0 : i32
    %c0_i32_0 = arith.constant 0 : i32
    %c0_i32_1 = arith.constant 0 : i32
    return %c0_i32, %c0_i32_0 : i32, i32
  }
  func.func @transform_2(%arg0: i32) -> (i32, i32) {
    %c0_i32 = arith.constant 0 : i32
    %c0_i32_0 = arith.constant 0 : i32
    return %arg0, %c0_i32 : i32, i32
  }
}

</mosaic_0001>

<llo_original>
// kernel: tpu_custom_call.1
$region0: #{tpu_custom_call.1}
  #allocation0 [shape = 'u32[]', space=smem, size = 0x4, offset = 0x4, fixed_abs, tag = 'smem constant byte address 0x4 - core index']
  #allocation1 [shape = 'u32[72,128]{1,0:T(1,128)}', space=vmem, size = 0x9000, scoped, tag = 'internal scratch']
  %s0 = inlined_call_operand.hbm [shape: f32[16,32], index: 0, kind: input, shape index: {}]
  %s1 = inlined_call_operand.hbm [shape: f32[1,32], index: 1, kind: input, shape index: {}]
  %s2 = inlined_call_operand.hbm [shape: f32[16,32], index: 2, kind: output, shape index: {}]
  %s3 = sld [smem:[#allocation0]]
  $region49: #{tpu_custom_call.1} parent=0
    _
  %s5 = ssub.s32 1, %s3
  %s6 = scalar_select 0, %s5, %s3
  $region1: #{tpu_custom_call.1} parent=0
    #allocation2 [shape = 'u8[8192]{0}', space=vmem, size = 0x2000, scoped, tag = 'input window, operand 0']
    #allocation3 [shape = 's32[2]{0}', space=sflag, size = 0x8, scoped, tag = 'scoped memory for tpu_custom_call.1']
    #allocation4 [shape = 's32[2]{0}', space=sflag, size = 0x8, scoped, tag = 'scoped memory for tpu_custom_call.1']
    #allocation5 [shape = 'u8[512]{0}', space=vmem, size = 0x400, scoped, tag = 'input window, operand 1, single buffered']
    #allocation6 [shape = 's32[1]{0}', space=sflag, size = 0x4, scoped, tag = 'scoped memory for tpu_custom_call.1']
    #allocation7 [shape = 'u8[8192]{0}', space=vmem, size = 0x2000, scoped, tag = 'output window, operand 0']
    %7 = vsyncpa [#allocation3], 0
    %s8 = scalar_lea.sflag [#allocation3], 1
    %9 = vsyncpa %s8, 0
    %10 = vsyncpa [#allocation6], 0
    %11 = vsyncpa [#allocation4], 0
    %s12 = scalar_lea.sflag [#allocation4], 1
    %13 = vsyncpa %s12, 0
    loop: start=0, step=1, limit=4
    $region2: #{tpu_custom_call.1} parent=1 // loop_pre_header
      _
    $region3: #{tpu_custom_call.1} parent=1 // loop_header
      %s15 = sphi 0, %s19
      %p16 = scmp.ge.s32.totalorder %s15, 4
      %s25 = sphi 0, %s27
      %s28 = sphi 0, %s25
      %s29 = sphi 0, %s28
      %s45 = sphi 0, %s29
      %s49 = sphi 0, %s49
      %s51 = sphi 0, %s49
      %s52 = sphi 0, %s51
      %s66 = sphi 0, %s52
      %s72 = sphi 0, %s74
      %s75 = sphi 0, %s72
      %s76 = sphi 0, %s75
      %s92 = sphi 0, %s76
    $region4: #{tpu_custom_call.1} parent=1 // loop_header_branch
      %18 = sbr.rel (%p16) target = $region8
    $region5: #{tpu_custom_call.1} parent=1 // loop_body
      %s20 = ssub.s32 %s15, 1
      %s21 = ssub.s32 %s15, 2
      %s22 = sadd.s32 %s15, 1
      %s23 = ssub.s32 %s15, %s22
      %p24 = scmp.eq.s32.totalorder %s23, 0
      %s26 = sadd.s32 %s25, 1
      %s27 = scalar_select %p24, %s25, %s26
      %p30 = pneg %p24
      %p31 = scmp.eq.s32.totalorder %s15, 1
      %p32 = por %p30, %p31
      %p33 = scmp.ne.s32.totalorder %s25, %s28
      %p34 = scmp.eq.s32.totalorder %s15, 0
      %p35 = por %p33, %p34
      %p36 = scmp.ne.s32.totalorder %s25, %s28
      %p37 = scmp.eq.s32.totalorder %s20, 1
      %p38 = por %p36, %p37
      %p39 = scmp.ne.s32.totalorder %s28, %s29
      %p40 = scmp.eq.s32.totalorder %s20, 0
      %p41 = por %p39, %p40
      %p42 = scmp.ne.s32.totalorder %s28, %s29
      %p43 = scmp.eq.s32.totalorder %s21, 1
      %p44 = por %p42, %p43
      %p46 = scmp.ne.s32.totalorder %s29, %s45
      %p47 = scmp.eq.s32.totalorder %s21, 0
      %p48 = por %p46, %p47
      %s50 = sadd.s32 %s49, 1
      %p53 = scmp.eq.s32.totalorder %s15, 1
      %p54 = scmp.ne.s32.totalorder %s49, %s51
      %p55 = scmp.eq.s32.totalorder %s15, 0
      %p56 = por %p54, %p55
      %p57 = scmp.ne.s32.totalorder %s49, %s51
      %p58 = scmp.eq.s32.totalorder %s20, 1
      %p59 = por %p57, %p58
      %p60 = scmp.ne.s32.totalorder %s51, %s52
      %p61 = scmp.eq.s32.totalorder %s20, 0
      %p62 = por %p60, %p61
      %p63 = scmp.ne.s32.totalorder %s51, %s52
      %p64 = scmp.eq.s32.totalorder %s21, 1
      %p65 = por %p63, %p64
      %p67 = scmp.ne.s32.totalorder %s52, %s66
      %p68 = scmp.eq.s32.totalorder %s21, 0
      %p69 = por %p67, %p68
      %s70 = ssub.s32 %s15, %s22
      %p71 = scmp.eq.s32.totalorder %s70, 0
      %s73 = sadd.s32 %s72, 1
      %s74 = scalar_select %p71, %s72, %s73
      %p77 = pneg %p71
      %p78 = scmp.eq.s32.totalorder %s15, 1
      %p79 = por %p77, %p78
      %p80 = scmp.ne.s32.totalorder %s72, %s75
      %p81 = scmp.eq.s32.totalorder %s15, 0
      %p82 = por %p80, %p81
      %p83 = scmp.ne.s32.totalorder %s72, %s75
      %p84 = scmp.eq.s32.totalorder %s20, 1
      %p85 = por %p83, %p84
      %p86 = scmp.ne.s32.totalorder %s75, %s76
      %p87 = scmp.eq.s32.totalorder %s20, 0
      %p88 = por %p86, %p87
      %p89 = scmp.ne.s32.totalorder %s75, %s76
      %p90 = scmp.eq.s32.totalorder %s21, 1
      %p91 = por %p89, %p90
      %p93 = scmp.ne.s32.totalorder %s76, %s92
      %p94 = scmp.eq.s32.totalorder %s21, 0
      %p95 = por %p93, %p94
      %p96 = scmp.le.s32.totalorder 1, %s15
      %p97 = scmp.lt.s32.totalorder %s15, 3
      %p98 = pnand %p96, %p97
      %p99 = pneg %p98
      // Predicated region
      $region9: #{tpu_custom_call.1} parent=5 // pred_check
        _
      $region10: #{tpu_custom_call.1} parent=5 // pred_check_branch
        %101 = sbr.rel (%p98) target = $region12
      $region11: #{tpu_custom_call.1} parent=5 // pred_region
        %s102 = ssub.s32 %s15, 1
        // Predicated region
        $region13: #{tpu_custom_call.1} parent=11 // pred_check
          %p103 = pneg %p62
        $region14: #{tpu_custom_call.1} parent=11 // pred_check_branch
          %105 = sbr.rel (%p103) target = $region16
        $region15: #{tpu_custom_call.1} parent=11 // pred_region
          %107 = vsyncadd [#allocation6], 0
          %s109 = sshll.u32 %s1, 4
          %s110 = int_to_ptr.hbm [resolvable:$true] %s109
          %s111 = sshll.u32 [#allocation5], 4
          %s112 = int_to_ptr.vmem [resolvable:$true] %s111
          %114 = dma.hbm_to_vmem [thread:$0]  %s110, 16, %s112, [#allocation6]
        $region16: #{tpu_custom_call.1} parent=11 // pred_fallthru
          _
      $region12: #{tpu_custom_call.1} parent=5 // pred_fallthru
        _
      %p115 = scmp.lt.s32.totalorder %s15, 2
      // Predicated region
      $region17: #{tpu_custom_call.1} parent=5 // pred_check
        %p116 = pneg %p115
      $region18: #{tpu_custom_call.1} parent=5 // pred_check_branch
        %118 = sbr.rel (%p116) target = $region20
      $region19: #{tpu_custom_call.1} parent=5 // pred_region
        // Predicated region
        $region21: #{tpu_custom_call.1} parent=19 // pred_check
          %p119 = pneg %p35
        $region22: #{tpu_custom_call.1} parent=19 // pred_check_branch
          %121 = sbr.rel (%p119) target = $region24
        $region23: #{tpu_custom_call.1} parent=19 // pred_region
          %s122 = sand.u32 %s25, 1
          %s123 = scalar_lea.sflag [#allocation3], %s122
          %s124 = sand.u32 %s25, 1
          %s125 = smul.addr %s124, 8
          %s126 = scalar_lea.vmem [#allocation2], %s125
          %128 = vsyncadd %s123, 0
          %s129 = smul.addr %s15, 8
          %s130 = scalar_lea.hbm %s0, %s129
          %s132 = sshll.u32 %s130, 4
          %s133 = int_to_ptr.hbm [resolvable:$true] %s132
          %s134 = sshll.u32 %s126, 4
          %s135 = int_to_ptr.vmem [resolvable:$true] %s134
          %137 = dma.hbm_to_vmem [thread:$0]  %s133, 128, %s135, %s123
        $region24: #{tpu_custom_call.1} parent=19 // pred_fallthru
          _
      $region20: #{tpu_custom_call.1} parent=5 // pred_fallthru
        _
      %p138 = scmp.le.s32.totalorder 1, %s15
      %p139 = scmp.lt.s32.totalorder %s15, 3
      %p140 = pnand %p138, %p139
      %p141 = pneg %p140
      // Predicated region
      $region25: #{tpu_custom_call.1} parent=5 // pred_check
        _
      $region26: #{tpu_custom_call.1} parent=5 // pred_check_branch
        %143 = sbr.rel (%p140) target = $region28
      $region27: #{tpu_custom_call.1} parent=5 // pred_region
        %s144 = ssub.s32 %s15, 1
        %s145 = sand.u32 %s28, 1
        %s146 = scalar_lea.sflag [#allocation3], %s145
        %s147 = sand.u32 %s28, 1
        %s148 = smul.addr %s147, 8
        %s149 = scalar_lea.vmem [#allocation2], %s148
        // Predicated region
        $region29: #{tpu_custom_call.1} parent=27 // pred_check
          %p150 = pneg %p41
        $region30: #{tpu_custom_call.1} parent=27 // pred_check_branch
          %152 = sbr.rel (%p150) target = $region32
        $region31: #{tpu_custom_call.1} parent=27 // pred_region
          %154 = dma.done %s146, 128
        $region32: #{tpu_custom_call.1} parent=27 // pred_fallthru
          _
        // Predicated region
        $region33: #{tpu_custom_call.1} parent=27 // pred_check
          %p155 = pneg %p62
        $region34: #{tpu_custom_call.1} parent=27 // pred_check_branch
          %157 = sbr.rel (%p155) target = $region36
        $region35: #{tpu_custom_call.1} parent=27 // pred_region
          %159 = dma.done [#allocation6], 16
        $region36: #{tpu_custom_call.1} parent=27 // pred_fallthru
          _
        %s160 = sand.u32 %s28, 1
        %s161 = scalar_lea.sflag [#allocation3], %s160
        %s162 = sand.u32 %s28, 1
        %s163 = smul.addr %s162, 8
        %s164 = scalar_lea.vmem [#allocation2], %s163
        %p165 = pneg %p41
        %p166 = pneg %p38
        %p167 = pneg %p62
        %p168 = pneg %p59
        %p169 = pneg %p88
        %p170 = pneg %p85
        %s171 = sand.u32 %s75, 1
        %s172 = scalar_lea.sflag [#allocation4], %s171
        %s173 = sand.u32 %s75, 1
        %s174 = smul.addr %s173, 8
        %s175 = scalar_lea.vmem [#allocation7], %s174
        %v176 = vld [vmem:[%s149] sm:$0xff]
        %v177 = vmul.f32 %v176, %v176
        %vm178 = vcmask 261120
        %v179 = vsel %vm178, %v177, 0.0
        %180 = vadd.xlane.f32.xlu0 %v179
        %v181 = vpop.xlane.xlu0 %180
        %v182 = vrcp.pop 32.0
        %v183 = vmul.f32 32.0, %v182
        %v184 = vsub.f32 1.0, %v183
        %v185 = vmul.f32 %v182, %v184
        %v186 = vadd.f32 %v182, %v185
        %vm187 = vweird.f32 %v182
        %v188 = vsel %vm187, %v182, %v186
        %v189 = vmul.f32 %v181, %v188
        %v190 = vadd.f32 %v189, 1e-05
        %v191 = vrsqrt.pop %v190
        %v192 = vmul.f32 %v191, %v190
        %v193 = vmul.f32 %v192, %v191
        %v194 = vmul.f32 0.5, %v193
        %v195 = vsub.f32 1.5, %v194
        %v196 = vmul.f32 %v191, %v195
        %vm197 = vweird.f32 %v190
        %vm198 = vweird.f32 %v191
        %vm199 = vmor %vm197, %vm198
        %v200 = vsel %vm199, %v191, %v196
        %v201 = vmul.f32 %v176, %v200
        %v202 = vld [vmem:[#allocation5] sm:$0x1]
        %v204 = vperm.slane %v202, 0
        %v206 = vmul.f32 %v201, %v204
        %207 = vst.msk [vmem:[%s175] sm:$0xff] %vm178, %v206
        %s208 = sand.u32 %s75, 1
        %s209 = scalar_lea.sflag [#allocation4], %s208
        %s210 = sand.u32 %s75, 1
        %s211 = smul.addr %s210, 8
        %s212 = scalar_lea.vmem [#allocation7], %s211
        // Predicated region
        $region37: #{tpu_custom_call.1} parent=27 // pred_check
          %p213 = pneg %p85
        $region38: #{tpu_custom_call.1} parent=27 // pred_check_branch
          %215 = sbr.rel (%p213) target = $region40
        $region39: #{tpu_custom_call.1} parent=27 // pred_region
          %217 = vsyncadd %s209, 0
          %s218 = smul.addr %s20, 8
          %s219 = scalar_lea.hbm %s2, %s218
          %s221 = sshll.u32 %s212, 4
          %s222 = int_to_ptr.vmem [resolvable:$true] %s221
          %s223 = sshll.u32 %s219, 4
          %s224 = int_to_ptr.hbm [resolvable:$true] %s223
          %226 = dma.vmem_to_hbm [thread:$0]  %s222, 128, %s224, %s209
        $region40: #{tpu_custom_call.1} parent=27 // pred_fallthru
          _
      $region28: #{tpu_custom_call.1} parent=5 // pred_fallthru
        _
      %p227 = scmp.le.s32.totalorder 2, %s15
      // Predicated region
      $region41: #{tpu_custom_call.1} parent=5 // pred_check
        %p228 = pneg %p227
      $region42: #{tpu_custom_call.1} parent=5 // pred_check_branch
        %230 = sbr.rel (%p228) target = $region44
      $region43: #{tpu_custom_call.1} parent=5 // pred_region
        %s231 = ssub.s32 %s15, 2
        // Predicated region
        $region45: #{tpu_custom_call.1} parent=43 // pred_check
          %p232 = pneg %p91
        $region46: #{tpu_custom_call.1} parent=43 // pred_check_branch
          %234 = sbr.rel (%p232) target = $region48
        $region47: #{tpu_custom_call.1} parent=43 // pred_region
          %s235 = sand.u32 %s76, 1
          %s236 = scalar_lea.sflag [#allocation4], %s235
          %s237 = sand.u32 %s76, 1
          %s238 = smul.addr %s237, 8
          %s239 = scalar_lea.vmem [#allocation7], %s238
          %241 = dma.done %s236, 128
        $region48: #{tpu_custom_call.1} parent=43 // pred_fallthru
          _
      $region44: #{tpu_custom_call.1} parent=5 // pred_fallthru
        _
    $region6: #{tpu_custom_call.1} parent=1 // loop_footer
      %s19 = sadd.s32 1, %s15
    $region7: #{tpu_custom_call.1} parent=1 // loop_footer_branch
      %14 = sbr.rel target = $region3
    $region8: #{tpu_custom_call.1} parent=1 // loop_exit
      _
    %242 = vsyncpa [#allocation3], 1
    %s243 = scalar_lea.sflag [#allocation3], 1
    %244 = vsyncpa %s243, 1
    %245 = vsyncpa [#allocation6], 1
    %246 = vsyncpa [#allocation4], 1
    %s247 = scalar_lea.sflag [#allocation4], 1
    %248 = vsyncpa %s247, 1

</llo_original>
